<compile_context>
chip_gen: v7x
topology: tpu7x:2x2x1
jax: 0.10.0
libtpu: 0.0.40
codegen_flags: <defaults>
</compile_context>

<pallas_src>
import functools

import jax
import jax.numpy as jnp
from jax import lax
from jax.experimental import pallas as pl
from jax.experimental.pallas import tpu as pltpu


def _sum_head_kernel(x_ref, w_ref, b_ref, out_ref):
    # x_ref:   (TM, D)   input rows, native dtype
    # w_ref:   (8, D)    folded weight, rows 0/1 = [w_beat+w_down, w_down], rest zero
    # b_ref:   (2, 1)    folded bias (f32): [b_beat+b_down, b_down]
    # out_ref: (2, TM)   f32 -- row 0 = beat logits, row 1 = downbeat logits
    #
    # y = W' @ x^T computed directly in (8, TM) layout so the result is already
    # lane-dense (TM on the lane axis); no XLU transpose, no masked 1-lane stores.
    y = lax.dot_general(
        w_ref[...], x_ref[...],
        dimension_numbers=(((1,), (1,)), ((), ())),
        preferred_element_type=jnp.float32,
    )                                        # (8, TM) f32
    out_ref[...] = y[0:2, :] + b_ref[...]    # keep the 2 real rows, add bias


@functools.partial(jax.jit, static_argnames=("max_tile_rows",))
def sum_head_forward(x, weight, bias, *, max_tile_rows=1024):
    """x: (B, T, D) any float dtype; weight: (2, D) (PyTorch Linear layout); bias: (2,)."""
    B, T, D = x.shape
    rows = B * T
    xf = x.reshape(rows, D)                      # free reshape, keep native dtype

    # Fold beat = logit0 + logit1 into the (tiny) constants; pad weight to 8 rows
    # so the MXU matmul has an aligned sublane dimension.
    w32 = weight.astype(jnp.float32)
    b32 = bias.astype(jnp.float32)
    w_folded = jnp.stack([w32[0] + w32[1], w32[1]], axis=0)          # (2, D)
    w_padded = jnp.zeros((8, D), jnp.float32).at[0:2].set(w_folded)
    w_padded = w_padded.astype(x.dtype)                              # match x dtype
    b_folded = jnp.stack([b32[0] + b32[1], b32[1]]).reshape(2, 1)    # (2, 1) f32

    itemsize = jnp.dtype(x.dtype).itemsize
    if rows <= max_tile_rows:
        # Single block: block dims equal the full array dims, so any `rows` works.
        tile_rows = rows
    else:
        # Keep the double-buffered x tile under ~8 MiB of VMEM; tile must be a
        # multiple of 128 so the (2, tile_rows) output block is lane-aligned.
        budget_rows = (8 * 1024 * 1024) // (2 * D * itemsize)
        tile_rows = max(128, min(max_tile_rows, (budget_rows // 128) * 128))

    grid = (pl.cdiv(rows, tile_rows),)           # last block may be partial

    out = pl.pallas_call(
        _sum_head_kernel,
        out_shape=jax.ShapeDtypeStruct((2, rows), jnp.float32),
        grid=grid,
        in_specs=[
            pl.BlockSpec((tile_rows, D), lambda i: (i, 0)),   # x row tile
            pl.BlockSpec((8, D), lambda i: (0, 0)),           # full (padded) weight
            pl.BlockSpec((2, 1), lambda i: (0, 0)),           # full bias
        ],
        out_specs=pl.BlockSpec((2, tile_rows), lambda i: (0, i)),
        compiler_params=pltpu.CompilerParams(
            dimension_semantics=("parallel",),
        ),
        cost_estimate=pl.CostEstimate(
            flops=2 * rows * D * 2,
            bytes_accessed=rows * D * itemsize + 2 * rows * 4,
            transcendentals=0,
        ),
    )(xf, w_padded, b_folded)

    beat = out[0].reshape(B, T)
    down = out[1].reshape(B, T)
    return {"beat": beat, "downbeat": down}


def _reference(x, weight, bias):
    logits = jnp.einsum("btd,cd->btc", x, weight) + bias   # (B, T, 2)
    beat = logits[..., 0].astype(jnp.float32) + logits[..., 1].astype(jnp.float32)
    down = logits[..., 1].astype(jnp.float32)
    return {"beat": beat, "downbeat": down}


if __name__ == "__main__":
    key = jax.random.PRNGKey(0)
    k_x, k_w, k_b = jax.random.split(key, 3)

    # Small shape consistent with the module: batch=2, time=8, input_dim=32.
    B, T, D = 2, 8, 32
    x = jax.random.normal(k_x, (B, T, D), dtype=jnp.float32)
    # nn.Linear(input_dim, 2): weight (2, D), bias (2,) — deterministic init.
    bound = 1.0 / jnp.sqrt(D)
    weight = jax.random.uniform(k_w, (2, D), minval=-bound, maxval=bound,
                                dtype=jnp.float32)
    bias = jax.random.uniform(k_b, (2,), minval=-bound, maxval=bound,
                              dtype=jnp.float32)

    out = sum_head_forward(x, weight, bias)
    jax.block_until_ready(out)
    ref = _reference(x, weight, bias)
    assert out["beat"].shape == (B, T) and out["downbeat"].shape == (B, T)
    assert jnp.allclose(out["beat"], ref["beat"], atol=1e-3, rtol=1e-3)
    assert jnp.allclose(out["downbeat"], ref["downbeat"], atol=1e-3, rtol=1e-3)

    # Also exercise the tiled path (grid > 1, lane-dense (2, tile) output blocks).
    B2, T2, D2 = 2, 1024, 64
    x2 = jax.random.normal(k_x, (B2, T2, D2), dtype=jnp.float32)
    bound2 = 1.0 / jnp.sqrt(D2)
    w2 = jax.random.uniform(k_w, (2, D2), minval=-bound2, maxval=bound2,
                            dtype=jnp.float32)
    b2 = jax.random.uniform(k_b, (2,), minval=-bound2, maxval=bound2,
                            dtype=jnp.float32)
    out2 = sum_head_forward(x2, w2, b2)
    jax.block_until_ready(out2)
    ref2 = _reference(x2, w2, b2)
    assert out2["beat"].shape == (B2, T2) and out2["downbeat"].shape == (B2, T2)
    assert jnp.allclose(out2["beat"], ref2["beat"], atol=1e-3, rtol=1e-3)
    assert jnp.allclose(out2["downbeat"], ref2["downbeat"], atol=1e-3, rtol=1e-3)

    print("KERNEL_OK")
</pallas_src>

<mosaic_0001>
module attributes {stable_mosaic.version = 11 : i64} {
  func.func @_sum_head_kernel(%arg0: i32, %arg1: memref<16x32xf32, #tpu.memory_space<vmem>>, %arg2: memref<8x32xf32, #tpu.memory_space<vmem>>, %arg3: memref<2x1xf32, #tpu.memory_space<vmem>>, %arg4: memref<2x16xf32, #tpu.memory_space<vmem>>) attributes {dimension_semantics = [#tpu.dimension_semantics<parallel>], iteration_bounds = array<i64: 1>, scalar_prefetch = 0 : i64, scratch_operands = 0 : i64, tpu.core_type = #tpu.core_type<tc>, window_params = [{transform_indices = @transform_0, window_bounds = array<i64: 16, 32>}, {pipeline_mode = #tpu.pipeline_mode<synchronous>, transform_indices = @transform_1, window_bounds = array<i64: 8, 32>}, {pipeline_mode = #tpu.pipeline_mode<synchronous>, transform_indices = @transform_2, window_bounds = array<i64: 2, 1>}, {transform_indices = @transform_3, window_bounds = array<i64: 2, 16>}]} {
    %c0 = arith.constant 0 : index
    %c0_0 = arith.constant 0 : index
    %0 = vector.load %arg2[%c0, %c0_0] : memref<8x32xf32, #tpu.memory_space<vmem>>, vector<8x32xf32>
    %c0_1 = arith.constant 0 : index
    %c0_2 = arith.constant 0 : index
    %1 = vector.load %arg1[%c0_1, %c0_2] : memref<16x32xf32, #tpu.memory_space<vmem>>, vector<16x32xf32>
    %cst = arith.constant dense<0.000000e+00> : vector<8x16xf32>
    %2 = tpu.matmul %0, %1, %cst {dimension_numbers = #tpu.dot_dimension_numbers<[1], [1], [0], [0], [0, 0, 1, 0], [], []>} : vector<8x32xf32>, vector<16x32xf32>, vector<8x16xf32> -> vector<8x16xf32>
    %3 = vector.extract_strided_slice %2 {offsets = [0, 0], sizes = [2, 16], strides = [1, 1]} : vector<8x16xf32> to vector<2x16xf32>
    %c0_3 = arith.constant 0 : index
    %c0_4 = arith.constant 0 : index
    %4 = vector.load %arg3[%c0_3, %c0_4] : memref<2x1xf32, #tpu.memory_space<vmem>>, vector<2x1xf32>
    %5 = vector.broadcast %4 : vector<2x1xf32> to vector<2x16xf32>
    %6 = arith.addf %3, %5 : vector<2x16xf32>
    %c0_5 = arith.constant 0 : index
    %c0_6 = arith.constant 0 : index
    %7 = vector.load %arg4[%c0_5, %c0_6] : memref<2x16xf32, #tpu.memory_space<vmem>>, vector<2x16xf32>
    tpu.vector_store %arg4[%c0_5, %c0_6], %6 {strides = array<i32>} : memref<2x16xf32, #tpu.memory_space<vmem>>, vector<2x16xf32>,
    return
  }
  func.func @transform_0(%arg0: i32) -> (i32, i32) {
    %c0_i32 = arith.constant 0 : i32
    %c0_i32_0 = arith.constant 0 : i32
    return %arg0, %c0_i32 : i32, i32
  }
  func.func @transform_1(%arg0: i32) -> (i32, i32) {
    %c0_i32 = arith.constant 0 : i32
    %c0_i32_0 = arith.constant 0 : i32
    %c0_i32_1 = arith.constant 0 : i32
    return %c0_i32, %c0_i32_0 : i32, i32
  }
  func.func @transform_2(%arg0: i32) -> (i32, i32) {
    %c0_i32 = arith.constant 0 : i32
    %c0_i32_0 = arith.constant 0 : i32
    %c0_i32_1 = arith.constant 0 : i32
    return %c0_i32, %c0_i32_0 : i32, i32
  }
  func.func @transform_3(%arg0: i32) -> (i32, i32) {
    %c0_i32 = arith.constant 0 : i32
    %c0_i32_0 = arith.constant 0 : i32
    return %c0_i32, %arg0 : i32, i32
  }
}

</mosaic_0001>

<llo_original>
// kernel: squeeze.11
$region0: #{squeeze.11}
  %s0 = inlined_call_operand.vmem [shape: f32[16], index: 0, kind: input, shape index: {}]
  %s1 = inlined_call_operand.hbm [shape: f32[2,8], index: 1, kind: output, shape index: {}]
  $region1: #{squeeze.11} parent=0
    #allocation0 [shape = 'u8[1024]{0}', space=vmem, size = 0x400, scoped, tag = 'operand span for operand 1']
    #allocation1 [shape = 's32[1]{0}', space=sflag, size = 0x4, scoped, tag = 'scoped memory for squeeze.11']
    #allocation2 [shape = 'u8[4096]{0}', space=vmem, size = 0x1000, scoped, tag = 'scoped mem for output reshape']
    #allocation3 [shape = 'u8[4096]{0}', space=vmem, size = 0x1000, scoped, tag = 'scoped mem for input reshape']
    %2 = vsyncpa [#allocation1], 0
    %s4 = sshllo.u32 0, 1
    %v5 = vld [vmem:[%s0] sm:%s4]
    %6 = vst [vmem:[#allocation3] sm:%s4] %v5
    %v7 = vld [vmem:[#allocation3] sm:$0x1]
    %vm8 = vcmask 64512
    %9 = vst.msk [vmem:[#allocation2] sm:$0x1] %vm8, %v7
    %v10 = vld [vmem:[#allocation3] sm:$0x1]
    %11 = vrot.lane.b32.xlu0 %v10, 120
    %v12 = vpop.permute.xlu0 %11
    %vm13 = vcmask 64512
    %s14 = scalar_lea.vmem [#allocation2], 1
    %15 = vst.msk [vmem:[%s14] sm:$0x1] %vm13, %v12
    %s17 = sshllo.u32 0, 2
    %v19 = vld [vmem:[#allocation2] sm:%s17]
    %s20 = sshllo.u32 0, 2
    %21 = vst [vmem:[#allocation0] sm:%s20] %v19
    %s23 = ssub.s32 32, 32
    %24 = vsyncadd [#allocation1], %s23
    %s26 = sshll.u32 [#allocation0], 4
    %s27 = int_to_ptr.vmem [resolvable:$true] %s26
    %29 = dma.vmem_to_hbm [thread:$0]  %s27, 32, %s1, [#allocation1]
    %30 = dma.done [#allocation1], 32
    %31 = vsyncpa [#allocation1], 1

// kernel: sum_head_forward.1
$region0: #{sum_head_forward.1}
  #allocation0 [shape = 'u32[]', space=smem, size = 0x4, offset = 0x4, fixed_abs, tag = 'smem constant byte address 0x4 - core index']
  #allocation1 [shape = 'u32[144,128]{1,0:T(1,128)}', space=vmem, size = 0x12000, scoped, tag = 'internal scratch']
  %s0 = inlined_call_operand.vmem [shape: f32[16,32], index: 0, kind: input, shape index: {}]
  %s1 = inlined_call_operand.vmem [shape: f32[8,32], index: 1, kind: input, shape index: {}]
  %s2 = inlined_call_operand.vmem [shape: f32[2,1], index: 2, kind: input, shape index: {}]
  %s3 = inlined_call_operand.vmem [shape: f32[2,16], index: 3, kind: output, shape index: {}]
  %s4 = sld [smem:[#allocation0]]
  $region22: #{sum_head_forward.1} parent=0
    _
  %s6 = ssub.s32 1, %s4
  %s7 = scalar_select 0, %s6, %s4
  // Predicated region
  $region2: #{sum_head_forward.1} parent=0 // pred_check
    _
  $region3: #{sum_head_forward.1} parent=0 // pred_check_branch
    %9 = sbr.rel (0) target = $region5
  $region4: #{sum_head_forward.1} parent=0 // pred_region
    _
  $region5: #{sum_head_forward.1} parent=0 // pred_fallthru
    _
  // Predicated region
  $region6: #{sum_head_forward.1} parent=0 // pred_check
    _
  $region7: #{sum_head_forward.1} parent=0 // pred_check_branch
    %11 = sbr.rel (0) target = $region9
  $region8: #{sum_head_forward.1} parent=0 // pred_region
    _
  $region9: #{sum_head_forward.1} parent=0 // pred_fallthru
    _
  // Predicated region
  $region10: #{sum_head_forward.1} parent=0 // pred_check
    _
  $region11: #{sum_head_forward.1} parent=0 // pred_check_branch
    %13 = sbr.rel (0) target = $region13
  $region12: #{sum_head_forward.1} parent=0 // pred_region
    _
  $region13: #{sum_head_forward.1} parent=0 // pred_fallthru
    _
  %v14 = vld [vmem:[%s1] sm:$0xff]
  %v15 = vld [vmem:[%s0] sm:$0xff]
  %v16 = vld [vmem:[%s0 + $0x8] sm:$0xff]
  %vm17 = vcmask 261120
  %v19 = vsel %vm17, %v14, 0
  %v22 = vsel %vm17, %v15, 0
  %v25 = vsel %vm17, %v16, 0
  %27 = vmatprep.subr.mxu0 0.0
  %28 = vmatpush1.xpose.msra.mxu0 %v22
  %29 = vmatprep.subr.mxu0 0.0
  %30 = vmatpush1.xpose.msra.mxu0 %v25
  %31 = vmatprep.subr.mxu0 0.0
  %32 = vmatpush1.xpose.msra.mxu0 0.0
  %33 = vmatprep.subr.mxu0 0.0
  %34 = vmatpush1.xpose.msra.mxu0 0.0
  %35 = vmatprep.subr.mxu0 0.0
  %36 = vmatpush1.xpose.msra.mxu0 0.0
  %37 = vmatprep.subr.mxu0 0.0
  %38 = vmatpush1.xpose.msra.mxu0 0.0
  %39 = vmatprep.subr.mxu0 0.0
  %40 = vmatpush1.xpose.msra.mxu0 0.0
  %41 = vmatprep.subr.mxu0 0.0
  %42 = vmatpush1.xpose.msra.mxu0 0.0
  %43 = vmatprep.subr.mxu0 0.0
  %44 = vmatpush1.xpose.msra.mxu0 0.0
  %45 = vmatprep.subr.mxu0 0.0
  %46 = vmatpush1.xpose.msra.mxu0 0.0
  %47 = vmatprep.subr.mxu0 0.0
  %48 = vmatpush1.xpose.msra.mxu0 0.0
  %49 = vmatprep.subr.mxu0 0.0
  %50 = vmatpush1.xpose.msra.mxu0 0.0
  %51 = vmatprep.subr.mxu0 0.0
  %52 = vmatpush1.xpose.msra.mxu0 0.0
  %53 = vmatprep.subr.mxu0 0.0
  %54 = vmatpush1.xpose.msra.mxu0 0.0
  %55 = vmatprep.subr.mxu0 0.0
  %56 = vmatpush1.xpose.msra.mxu0 0.0
  %57 = vmatprep.subr.mxu0 0.0
  %58 = vmatpush1.xpose.msra.mxu0 0.0
  %59 = vmatprep.subr.mxu0 0.0
  %60 = vmatpush1.xpose.msra.mxu0 0.0
  %61 = vmatprep.subr.mxu0 0.0
  %62 = vmatpush1.xpose.msra.mxu0 0.0
  %63 = vmatprep.subr.mxu0 0.0
  %64 = vmatpush1.xpose.msra.mxu0 0.0
  %65 = vmatprep.subr.mxu0 0.0
  %66 = vmatpush1.xpose.msra.mxu0 0.0
  %67 = vmatprep.subr.mxu0 0.0
  %68 = vmatpush1.xpose.msra.mxu0 0.0
  %69 = vmatprep.subr.mxu0 0.0
  %70 = vmatpush1.xpose.msra.mxu0 0.0
  %71 = vmatprep.subr.mxu0 0.0
  %72 = vmatpush1.xpose.msra.mxu0 0.0
  %73 = vmatprep.subr.mxu0 0.0
  %74 = vmatpush1.xpose.msra.mxu0 0.0
  %75 = vmatprep.subr.mxu0 0.0
  %76 = vmatpush1.xpose.msra.mxu0 0.0
  %77 = vmatprep.subr.mxu0 0.0
  %78 = vmatpush1.xpose.msra.mxu0 0.0
  %79 = vmatprep.subr.mxu0 0.0
  %80 = vmatpush1.xpose.msra.mxu0 0.0
  %81 = vmatprep.subr.mxu0 0.0
  %82 = vmatpush1.xpose.msra.mxu0 0.0
  %83 = vmatprep.subr.mxu0 0.0
  %84 = vmatpush1.xpose.msra.mxu0 0.0
  %85 = vmatprep.subr.mxu0 0.0
  %86 = vmatpush1.xpose.msra.mxu0 0.0
  %87 = vmatprep.subr.mxu0 0.0
  %88 = vmatpush1.xpose.msra.mxu0 0.0
  %89 = vmatprep.subr.mxu0 0.0
  %90 = vmatpush1.xpose.msra.mxu0 0.0
  %91 = vmatprep.mubr.f32.mxu0 0.0
  %92 = vmatmul.mubr.f32.gmra.mrb[0].mxu0 %v19
  %v93 = vpop.f32.mrb[0].mxu0
  %v94 = vadd.f32 0.0, %v93
  %v95 = vpop.f32.mrb[0].mxu0
  %96 = vdwg.mxu0
  %v97 = vld [vmem:[%s2] sm:$0x3]
  %99 = vset.pattern.permute.xlu0 0
  %100 = vperm.xlu0 %99, %v97
  %v101 = vpop.permute.xlu0 %100
  %v103 = vadd.f32 %v94, %v101
  %vm104 = vcmask 123904
  %105 = vst.msk [vmem:[%s3] sm:$0x3] %vm104, %v103
  // Predicated region
  $region14: #{sum_head_forward.1} parent=0 // pred_check
    _
  $region15: #{sum_head_forward.1} parent=0 // pred_check_branch
    %107 = sbr.rel (0) target = $region17
  $region16: #{sum_head_forward.1} parent=0 // pred_region
    _
  $region17: #{sum_head_forward.1} parent=0 // pred_fallthru
    _
  // Predicated region
  $region18: #{sum_head_forward.1} parent=0 // pred_check
    _
  $region19: #{sum_head_forward.1} parent=0 // pred_check_branch
    %109 = sbr.rel (0) target = $region21
  $region20: #{sum_head_forward.1} parent=0 // pred_region
    _
  $region21: #{sum_head_forward.1} parent=0 // pred_fallthru
    _

</llo_original>
